<compile_context>
chip_gen: v7x
topology: tpu7x:2x2x1
jax: 0.10.0
libtpu: 0.0.40
codegen_flags: <defaults>
</compile_context>

<pallas_src>
import functools
import math

import jax
import jax.numpy as jnp
from jax.experimental import pallas as pl
from jax.experimental.pallas import tpu as pltpu

N_LAYERS = 8            # 7 fused-lrelu layers + 1 plain linear
LRELU_SLOPE = 0.2
LRELU_GAIN = math.sqrt(2.0)
PIXELNORM_EPS = 1e-8
LANE = 128
SUBLANE = 8
MAX_BATCH_TILE = 1024


def _round_up(n, m):
    return ((n + m - 1) // m) * m


def _supports_bf16_vpu():
    """v6e / v7x have a bf16-native VPU; v5e and older do not."""
    try:
        kind = jax.devices()[0].device_kind.lower()
    except Exception:
        return False
    return not any(t in kind for t in ("v2", "v3", "v4", "v5"))


def mapping_kernel(x_ref, w_first_ref, w_mid_ref, w_last_ref,
                   b_hid_ref, b_last_ref, out_ref, *,
                   d_in_real, n_mid, bf16_post):
    # x block: (TB, D_in_pad) f32 ; padded feature lanes are zero.
    x = x_ref[...].astype(jnp.float32)

    # --- PixelNorm over the *real* feature dim (padded lanes contribute 0) ---
    ss = jnp.sum(x * x, axis=1, keepdims=True) * (1.0 / d_in_real)
    x = (x * jax.lax.rsqrt(ss + PIXELNORM_EPS)).astype(jnp.bfloat16)

    def lin_lrelu(x_bf16, w_bf16, b_row_f32):
        # MXU matmul, f32 accumulation.
        h = jnp.dot(x_bf16, w_bf16, preferred_element_type=jnp.float32)
        # leaky_relu(h, 0.2); the sqrt(2) fused-lrelu gain is folded into the
        # NEXT layer's equalized-lr scale (exact rewrite), so no extra mul.
        if bf16_post:
            # bf16 VPU path (v6e/v7x): halves VALU work / vreg pressure,
            # costs one extra bf16 rounding per layer.
            h = h.astype(jnp.bfloat16) + b_row_f32.astype(jnp.bfloat16)
            return jnp.maximum(h, h * LRELU_SLOPE)
        h = h + b_row_f32
        return jnp.maximum(h, h * LRELU_SLOPE).astype(jnp.bfloat16)

    # Layer 0: input -> hidden.  Bias rows are loaded straight from the VMEM
    # ref (sublane-offset vld), not sliced out of a materialized (7,H) value.
    x = lin_lrelu(x, w_first_ref[...], b_hid_ref[0:1, :])

    # Layers 1..6: hidden -> hidden (stacked weights, static index)
    for i in range(n_mid):
        x = lin_lrelu(x, w_mid_ref[i], b_hid_ref[i + 1:i + 2, :])

    # Layer 7: hidden -> out, no activation
    h = jnp.dot(x, w_last_ref[...], preferred_element_type=jnp.float32)
    out_ref[...] = (h + b_last_ref[...]).astype(out_ref.dtype)


def prepare_mapping_params(weights, biases, lr_mul=0.01):
    """One-time parameter packing (hoisted out of the per-forward path):
    equalized-lr scale, sqrt(2) gain fold, transpose to (in, out), zero-pad
    to lane-dense shapes, cast to bf16, stack hidden layers."""
    assert len(weights) == N_LAYERS and len(biases) == N_LAYERS
    d_in = weights[0].shape[1]
    hidden = weights[0].shape[0]
    out_dim = weights[-1].shape[0]
    for w in weights[1:-1]:
        assert w.shape == (hidden, hidden)
    assert weights[-1].shape == (out_dim, hidden)

    d_in_pad = _round_up(d_in, LANE)
    h_pad = _round_up(hidden, LANE)
    o_pad = _round_up(out_dim, LANE)

    def prep_w(w, layer_idx, in_real, in_pad, out_pad):
        s = (1.0 / math.sqrt(in_real)) * lr_mul
        if layer_idx >= 1:          # this layer's input came from fused_lrelu
            s = s * LRELU_GAIN
        wt = (jnp.asarray(w, jnp.float32) * s).T                 # (in, out)
        wt = jnp.pad(wt, ((0, in_pad - wt.shape[0]),
                          (0, out_pad - wt.shape[1])))
        return wt.astype(jnp.bfloat16)

    def prep_b(b, out_pad):
        bb = jnp.asarray(b, jnp.float32) * lr_mul
        return jnp.pad(bb, (0, out_pad - bb.shape[0]))

    return {
        "w_first": prep_w(weights[0], 0, d_in, d_in_pad, h_pad),
        "w_mid": jnp.stack([prep_w(weights[i], i, hidden, h_pad, h_pad)
                            for i in range(1, N_LAYERS - 1)]),   # (6, H, H)
        "w_last": prep_w(weights[-1], N_LAYERS - 1, hidden, h_pad, o_pad),
        "b_hid": jnp.stack([prep_b(biases[i], h_pad)
                            for i in range(N_LAYERS - 1)]),      # (7, H)
        "b_last": prep_b(biases[-1], o_pad).reshape(1, o_pad),   # (1, O)
        "dims": (d_in, hidden, out_dim),
    }


@functools.partial(jax.jit, static_argnames=("out_dim", "bf16_post"))
def _mapping_forward(x, w_first, w_mid, w_last, b_hid, b_last, *,
                     out_dim, bf16_post):
    B, d_in = x.shape
    d_in_pad, h_pad = w_first.shape
    o_pad = w_last.shape[1]
    n_mid = w_mid.shape[0]

    # ---- Batch tiling: aim for >=2 grid steps (megacore / both v7x TCs),
    #      tile capped at 1024 rows; padded rows are zero, sliced off. ----
    b_pad8 = _round_up(B, SUBLANE)
    tb = max(SUBLANE, min(MAX_BATCH_TILE, _round_up(-(-b_pad8 // 2), SUBLANE)))
    b_pad = _round_up(b_pad8, tb)
    x_p = jnp.pad(x.astype(jnp.float32),
                  ((0, b_pad - B), (0, d_in_pad - d_in)))

    kernel = functools.partial(mapping_kernel, d_in_real=d_in, n_mid=n_mid,
                               bf16_post=bf16_post)

    weight_bytes = (w_first.size + w_mid.size + w_last.size) * 2 \
                   + (b_hid.size + b_last.size) * 4
    cost = pl.CostEstimate(
        flops=2 * b_pad * (d_in_pad * h_pad + n_mid * h_pad * h_pad
                           + h_pad * o_pad),
        transcendentals=b_pad,
        bytes_accessed=x_p.size * 4 + b_pad * o_pad * 4 + weight_bytes,
    )

    resident = pl.Buffered(1)   # params never change across grid steps
    out_p = pl.pallas_call(
        kernel,
        out_shape=jax.ShapeDtypeStruct((b_pad, o_pad), jnp.float32),
        grid_spec=pltpu.PrefetchScalarGridSpec(
            num_scalar_prefetch=0,
            grid=(b_pad // tb,),
            in_specs=[
                pl.BlockSpec((tb, d_in_pad), lambda i: (i, 0)),      # x (pipelined)
                pl.BlockSpec((d_in_pad, h_pad), lambda i: (0, 0),
                             pipeline_mode=resident),                # w_first
                pl.BlockSpec((n_mid, h_pad, h_pad), lambda i: (0, 0, 0),
                             pipeline_mode=resident),                # w_mid
                pl.BlockSpec((h_pad, o_pad), lambda i: (0, 0),
                             pipeline_mode=resident),                # w_last
                pl.BlockSpec((N_LAYERS - 1, h_pad), lambda i: (0, 0),
                             pipeline_mode=resident),                # b_hid
                pl.BlockSpec((1, o_pad), lambda i: (0, 0),
                             pipeline_mode=resident),                # b_last
            ],
            out_specs=pl.BlockSpec((tb, o_pad), lambda i: (i, 0)),
        ),
        compiler_params=pltpu.CompilerParams(
            dimension_semantics=("parallel",),
            vmem_limit_bytes=48 * 1024 * 1024,
        ),
        cost_estimate=cost,
    )(x_p, w_first, w_mid, w_last, b_hid, b_last)

    return out_p[:B, :out_dim]


def mapping_network_pallas(x, params, bf16_post=None):
    """x: (B, input_dim) f32. params: output of prepare_mapping_params()."""
    if bf16_post is None:
        bf16_post = _supports_bf16_vpu()
    _, _, out_dim = params["dims"]
    return _mapping_forward(x, params["w_first"], params["w_mid"],
                            params["w_last"], params["b_hid"],
                            params["b_last"],
                            out_dim=out_dim, bf16_post=bool(bf16_post))


def mapping_network_ref(x, weights, biases, lr_mul=0.01):
    """Pure-JAX f32 reference mirroring the PyTorch module exactly."""
    x = x.astype(jnp.float32)
    x = x * jax.lax.rsqrt(jnp.mean(x * x, axis=1, keepdims=True) + PIXELNORM_EPS)
    for i, (w, b) in enumerate(zip(weights, biases)):
        scale = (1.0 / math.sqrt(w.shape[1])) * lr_mul
        h = x @ (w.astype(jnp.float32) * scale).T + b.astype(jnp.float32) * lr_mul
        if i < N_LAYERS - 1:
            h = jnp.where(h >= 0.0, h, LRELU_SLOPE * h) * LRELU_GAIN
        x = h
    return x


if __name__ == "__main__":
    # Small shapes consistent with MappingNetwork(input_dim, out_dim, hidden_dim)
    batch, input_dim, hidden_dim, out_dim = 8, 32, 64, 16
    lr_mul = 0.01

    key = jax.random.PRNGKey(0)
    kx, *kps = jax.random.split(key, 1 + 2 * N_LAYERS)

    x = jax.random.normal(kx, (batch, input_dim), dtype=jnp.float32)

    # Torch-layout params: weight_i ~ randn(out_i, in_i) / lr_mul, small biases.
    dims = [input_dim] + [hidden_dim] * (N_LAYERS - 1) + [out_dim]
    weights, biases = [], []
    for i in range(N_LAYERS):
        in_d, out_d = dims[i], dims[i + 1]
        w = jax.random.normal(kps[2 * i], (out_d, in_d), dtype=jnp.float32) / lr_mul
        b = 0.1 * jax.random.normal(kps[2 * i + 1], (out_d,), dtype=jnp.float32) / lr_mul
        weights.append(w)
        biases.append(b)

    # One-time parameter packing (hoisted out of the forward path).
    params = prepare_mapping_params(weights, biases, lr_mul=lr_mul)

    out = mapping_network_pallas(x, params)
    out = jax.block_until_ready(out)

    ref = mapping_network_ref(x, weights, biases, lr_mul=lr_mul)
    assert out.shape == (batch, out_dim)

    # bf16 matmuls (and, on v6e/v7x, bf16 bias/lrelu) vs f32 reference: check
    # normalized / max error with a tolerance sized for the 8-layer bf16 chain.
    rel = float(jnp.linalg.norm(out - ref) / (jnp.linalg.norm(ref) + 1e-12))
    mx = float(jnp.max(jnp.abs(out - ref)))
    assert rel < 5e-2, f"relative error too large: {rel}"
    assert mx < 0.25, f"max abs error too large: {mx}"

    print("KERNEL_OK")
</pallas_src>

<mosaic_0001>
module attributes {stable_mosaic.version = 11 : i64} {
  func.func @mapping_kernel(%arg0: i32, %arg1: memref<8x128xf32, #tpu.memory_space<vmem>>, %arg2: memref<128x128xbf16, #tpu.memory_space<vmem>>, %arg3: memref<6x128x128xbf16, #tpu.memory_space<vmem>>, %arg4: memref<128x128xbf16, #tpu.memory_space<vmem>>, %arg5: memref<7x128xf32, #tpu.memory_space<vmem>>, %arg6: memref<1x128xf32, #tpu.memory_space<vmem>>, %arg7: memref<8x128xf32, #tpu.memory_space<vmem>>) attributes {dimension_semantics = [#tpu.dimension_semantics<parallel>], iteration_bounds = array<i64: 1>, scalar_prefetch = 0 : i64, scratch_operands = 0 : i64, tpu.core_type = #tpu.core_type<tc>, window_params = [{transform_indices = @transform_0, window_bounds = array<i64: 8, 128>}, {pipeline_mode = #tpu.pipeline_mode<synchronous>, transform_indices = @transform_1, window_bounds = array<i64: 128, 128>}, {pipeline_mode = #tpu.pipeline_mode<synchronous>, transform_indices = @transform_2, window_bounds = array<i64: 6, 128, 128>}, {pipeline_mode = #tpu.pipeline_mode<synchronous>, transform_indices = @transform_3, window_bounds = array<i64: 128, 128>}, {pipeline_mode = #tpu.pipeline_mode<synchronous>, transform_indices = @transform_4, window_bounds = array<i64: 7, 128>}, {pipeline_mode = #tpu.pipeline_mode<synchronous>, transform_indices = @transform_5, window_bounds = array<i64: 1, 128>}, {transform_indices = @transform_6, window_bounds = array<i64: 8, 128>}]} {
    %c0 = arith.constant 0 : index
    %c0_0 = arith.constant 0 : index
    %0 = vector.load %arg1[%c0, %c0_0] : memref<8x128xf32, #tpu.memory_space<vmem>>, vector<8x128xf32>
    %1 = arith.mulf %0, %0 : vector<8x128xf32>
    %cst = arith.constant dense<0.000000e+00> : vector<8xf32>
    %2 = vector.multi_reduction <add>, %1, %cst [1] : vector<8x128xf32> to vector<8xf32>
    %3 = vector.shape_cast %2 : vector<8xf32> to vector<8x1xf32>
    %cst_1 = arith.constant 3.125000e-02 : f32
    %4 = vector.broadcast %cst_1 : f32 to vector<8x1xf32>
    %5 = arith.mulf %3, %4 : vector<8x1xf32>
    %cst_2 = arith.constant 9.99999993E-9 : f32
    %6 = vector.broadcast %cst_2 : f32 to vector<8x1xf32>
    %7 = arith.addf %5, %6 : vector<8x1xf32>
    %8 = math.rsqrt %7 : vector<8x1xf32>
    %9 = vector.broadcast %8 : vector<8x1xf32> to vector<8x128xf32>
    %10 = arith.mulf %0, %9 : vector<8x128xf32>
    %11 = arith.truncf %10 : vector<8x128xf32> to vector<8x128xbf16>
    %c0_3 = arith.constant 0 : index
    %c0_4 = arith.constant 0 : index
    %12 = vector.load %arg2[%c0_3, %c0_4] : memref<128x128xbf16, #tpu.memory_space<vmem>>, vector<128x128xbf16>
    %c0_5 = arith.constant 0 : index
    %c0_6 = arith.constant 0 : index
    %13 = vector.load %arg5[%c0_5, %c0_6] : memref<7x128xf32, #tpu.memory_space<vmem>>, vector<1x128xf32>
    %cst_7 = arith.constant dense<0.000000e+00> : vector<8x128xf32>
    %14 = tpu.matmul %11, %12, %cst_7 {dimension_numbers = #tpu.dot_dimension_numbers<[1], [0], [0], [1], [0, 0, 1, 1], [], []>} : vector<8x128xbf16>, vector<128x128xbf16>, vector<8x128xf32> -> vector<8x128xf32>
    %15 = arith.truncf %14 : vector<8x128xf32> to vector<8x128xbf16>
    %16 = arith.truncf %13 : vector<1x128xf32> to vector<1x128xbf16>
    %17 = vector.broadcast %16 : vector<1x128xbf16> to vector<8x128xbf16>
    %18 = arith.addf %15, %17 : vector<8x128xbf16>
    %cst_8 = arith.constant 2.001950e-01 : bf16
    %19 = vector.broadcast %cst_8 : bf16 to vector<8x128xbf16>
    %20 = arith.mulf %18, %19 : vector<8x128xbf16>
    %21 = arith.maximumf %18, %20 : vector<8x128xbf16>
    %c0_9 = arith.constant 0 : index
    %c0_10 = arith.constant 0 : index
    %c0_11 = arith.constant 0 : index
    %22 = vector.load %arg3[%c0_9, %c0_10, %c0_11] : memref<6x128x128xbf16, #tpu.memory_space<vmem>>, vector<1x128x128xbf16>
    %23 = vector.shape_cast %22 : vector<1x128x128xbf16> to vector<128x128xbf16>
    %c1 = arith.constant 1 : index
    %c0_12 = arith.constant 0 : index
    %24 = vector.load %arg5[%c1, %c0_12] : memref<7x128xf32, #tpu.memory_space<vmem>>, vector<1x128xf32>
    %cst_13 = arith.constant dense<0.000000e+00> : vector<8x128xf32>
    %25 = tpu.matmul %21, %23, %cst_13 {dimension_numbers = #tpu.dot_dimension_numbers<[1], [0], [0], [1], [0, 0, 1, 1], [], []>} : vector<8x128xbf16>, vector<128x128xbf16>, vector<8x128xf32> -> vector<8x128xf32>
    %26 = arith.truncf %25 : vector<8x128xf32> to vector<8x128xbf16>
    %27 = arith.truncf %24 : vector<1x128xf32> to vector<1x128xbf16>
    %28 = vector.broadcast %27 : vector<1x128xbf16> to vector<8x128xbf16>
    %29 = arith.addf %26, %28 : vector<8x128xbf16>
    %cst_14 = arith.constant 2.001950e-01 : bf16
    %30 = vector.broadcast %cst_14 : bf16 to vector<8x128xbf16>
    %31 = arith.mulf %29, %30 : vector<8x128xbf16>
    %32 = arith.maximumf %29, %31 : vector<8x128xbf16>
    %c1_15 = arith.constant 1 : index
    %c0_16 = arith.constant 0 : index
    %c0_17 = arith.constant 0 : index
    %33 = vector.load %arg3[%c1_15, %c0_16, %c0_17] : memref<6x128x128xbf16, #tpu.memory_space<vmem>>, vector<1x128x128xbf16>
    %34 = vector.shape_cast %33 : vector<1x128x128xbf16> to vector<128x128xbf16>
    %c2 = arith.constant 2 : index
    %c0_18 = arith.constant 0 : index
    %35 = vector.load %arg5[%c2, %c0_18] : memref<7x128xf32, #tpu.memory_space<vmem>>, vector<1x128xf32>
    %cst_19 = arith.constant dense<0.000000e+00> : vector<8x128xf32>
    %36 = tpu.matmul %32, %34, %cst_19 {dimension_numbers = #tpu.dot_dimension_numbers<[1], [0], [0], [1], [0, 0, 1, 1], [], []>} : vector<8x128xbf16>, vector<128x128xbf16>, vector<8x128xf32> -> vector<8x128xf32>
    %37 = arith.truncf %36 : vector<8x128xf32> to vector<8x128xbf16>
    %38 = arith.truncf %35 : vector<1x128xf32> to vector<1x128xbf16>
    %39 = vector.broadcast %38 : vector<1x128xbf16> to vector<8x128xbf16>
    %40 = arith.addf %37, %39 : vector<8x128xbf16>
    %cst_20 = arith.constant 2.001950e-01 : bf16
    %41 = vector.broadcast %cst_20 : bf16 to vector<8x128xbf16>
    %42 = arith.mulf %40, %41 : vector<8x128xbf16>
    %43 = arith.maximumf %40, %42 : vector<8x128xbf16>
    %c2_21 = arith.constant 2 : index
    %c0_22 = arith.constant 0 : index
    %c0_23 = arith.constant 0 : index
    %44 = vector.load %arg3[%c2_21, %c0_22, %c0_23] : memref<6x128x128xbf16, #tpu.memory_space<vmem>>, vector<1x128x128xbf16>
    %45 = vector.shape_cast %44 : vector<1x128x128xbf16> to vector<128x128xbf16>
    %c3 = arith.constant 3 : index
    %c0_24 = arith.constant 0 : index
    %46 = vector.load %arg5[%c3, %c0_24] : memref<7x128xf32, #tpu.memory_space<vmem>>, vector<1x128xf32>
    %cst_25 = arith.constant dense<0.000000e+00> : vector<8x128xf32>
    %47 = tpu.matmul %43, %45, %cst_25 {dimension_numbers = #tpu.dot_dimension_numbers<[1], [0], [0], [1], [0, 0, 1, 1], [], []>} : vector<8x128xbf16>, vector<128x128xbf16>, vector<8x128xf32> -> vector<8x128xf32>
    %48 = arith.truncf %47 : vector<8x128xf32> to vector<8x128xbf16>
    %49 = arith.truncf %46 : vector<1x128xf32> to vector<1x128xbf16>
    %50 = vector.broadcast %49 : vector<1x128xbf16> to vector<8x128xbf16>
    %51 = arith.addf %48, %50 : vector<8x128xbf16>
    %cst_26 = arith.constant 2.001950e-01 : bf16
    %52 = vector.broadcast %cst_26 : bf16 to vector<8x128xbf16>
    %53 = arith.mulf %51, %52 : vector<8x128xbf16>
    %54 = arith.maximumf %51, %53 : vector<8x128xbf16>
    %c3_27 = arith.constant 3 : index
    %c0_28 = arith.constant 0 : index
    %c0_29 = arith.constant 0 : index
    %55 = vector.load %arg3[%c3_27, %c0_28, %c0_29] : memref<6x128x128xbf16, #tpu.memory_space<vmem>>, vector<1x128x128xbf16>
    %56 = vector.shape_cast %55 : vector<1x128x128xbf16> to vector<128x128xbf16>
    %c4 = arith.constant 4 : index
    %c0_30 = arith.constant 0 : index
    %57 = vector.load %arg5[%c4, %c0_30] : memref<7x128xf32, #tpu.memory_space<vmem>>, vector<1x128xf32>
    %cst_31 = arith.constant dense<0.000000e+00> : vector<8x128xf32>
    %58 = tpu.matmul %54, %56, %cst_31 {dimension_numbers = #tpu.dot_dimension_numbers<[1], [0], [0], [1], [0, 0, 1, 1], [], []>} : vector<8x128xbf16>, vector<128x128xbf16>, vector<8x128xf32> -> vector<8x128xf32>
    %59 = arith.truncf %58 : vector<8x128xf32> to vector<8x128xbf16>
    %60 = arith.truncf %57 : vector<1x128xf32> to vector<1x128xbf16>
    %61 = vector.broadcast %60 : vector<1x128xbf16> to vector<8x128xbf16>
    %62 = arith.addf %59, %61 : vector<8x128xbf16>
    %cst_32 = arith.constant 2.001950e-01 : bf16
    %63 = vector.broadcast %cst_32 : bf16 to vector<8x128xbf16>
    %64 = arith.mulf %62, %63 : vector<8x128xbf16>
    %65 = arith.maximumf %62, %64 : vector<8x128xbf16>
    %c4_33 = arith.constant 4 : index
    %c0_34 = arith.constant 0 : index
    %c0_35 = arith.constant 0 : index
    %66 = vector.load %arg3[%c4_33, %c0_34, %c0_35] : memref<6x128x128xbf16, #tpu.memory_space<vmem>>, vector<1x128x128xbf16>
    %67 = vector.shape_cast %66 : vector<1x128x128xbf16> to vector<128x128xbf16>
    %c5 = arith.constant 5 : index
    %c0_36 = arith.constant 0 : index
    %68 = vector.load %arg5[%c5, %c0_36] : memref<7x128xf32, #tpu.memory_space<vmem>>, vector<1x128xf32>
    %cst_37 = arith.constant dense<0.000000e+00> : vector<8x128xf32>
    %69 = tpu.matmul %65, %67, %cst_37 {dimension_numbers = #tpu.dot_dimension_numbers<[1], [0], [0], [1], [0, 0, 1, 1], [], []>} : vector<8x128xbf16>, vector<128x128xbf16>, vector<8x128xf32> -> vector<8x128xf32>
    %70 = arith.truncf %69 : vector<8x128xf32> to vector<8x128xbf16>
    %71 = arith.truncf %68 : vector<1x128xf32> to vector<1x128xbf16>
    %72 = vector.broadcast %71 : vector<1x128xbf16> to vector<8x128xbf16>
    %73 = arith.addf %70, %72 : vector<8x128xbf16>
    %cst_38 = arith.constant 2.001950e-01 : bf16
    %74 = vector.broadcast %cst_38 : bf16 to vector<8x128xbf16>
    %75 = arith.mulf %73, %74 : vector<8x128xbf16>
    %76 = arith.maximumf %73, %75 : vector<8x128xbf16>
    %c5_39 = arith.constant 5 : index
    %c0_40 = arith.constant 0 : index
    %c0_41 = arith.constant 0 : index
    %77 = vector.load %arg3[%c5_39, %c0_40, %c0_41] : memref<6x128x128xbf16, #tpu.memory_space<vmem>>, vector<1x128x128xbf16>
    %78 = vector.shape_cast %77 : vector<1x128x128xbf16> to vector<128x128xbf16>
    %c6 = arith.constant 6 : index
    %c0_42 = arith.constant 0 : index
    %79 = vector.load %arg5[%c6, %c0_42] : memref<7x128xf32, #tpu.memory_space<vmem>>, vector<1x128xf32>
    %cst_43 = arith.constant dense<0.000000e+00> : vector<8x128xf32>
    %80 = tpu.matmul %76, %78, %cst_43 {dimension_numbers = #tpu.dot_dimension_numbers<[1], [0], [0], [1], [0, 0, 1, 1], [], []>} : vector<8x128xbf16>, vector<128x128xbf16>, vector<8x128xf32> -> vector<8x128xf32>
    %81 = arith.truncf %80 : vector<8x128xf32> to vector<8x128xbf16>
    %82 = arith.truncf %79 : vector<1x128xf32> to vector<1x128xbf16>
    %83 = vector.broadcast %82 : vector<1x128xbf16> to vector<8x128xbf16>
    %84 = arith.addf %81, %83 : vector<8x128xbf16>
    %cst_44 = arith.constant 2.001950e-01 : bf16
    %85 = vector.broadcast %cst_44 : bf16 to vector<8x128xbf16>
    %86 = arith.mulf %84, %85 : vector<8x128xbf16>
    %87 = arith.maximumf %84, %86 : vector<8x128xbf16>
    %c0_45 = arith.constant 0 : index
    %c0_46 = arith.constant 0 : index
    %88 = vector.load %arg4[%c0_45, %c0_46] : memref<128x128xbf16, #tpu.memory_space<vmem>>, vector<128x128xbf16>
    %cst_47 = arith.constant dense<0.000000e+00> : vector<8x128xf32>
    %89 = tpu.matmul %87, %88, %cst_47 {dimension_numbers = #tpu.dot_dimension_numbers<[1], [0], [0], [1], [0, 0, 1, 1], [], []>} : vector<8x128xbf16>, vector<128x128xbf16>, vector<8x128xf32> -> vector<8x128xf32>
    %c0_48 = arith.constant 0 : index
    %c0_49 = arith.constant 0 : index
    %90 = vector.load %arg6[%c0_48, %c0_49] : memref<1x128xf32, #tpu.memory_space<vmem>>, vector<1x128xf32>
    %91 = vector.broadcast %90 : vector<1x128xf32> to vector<8x128xf32>
    %92 = arith.addf %89, %91 : vector<8x128xf32>
    %c0_50 = arith.constant 0 : index
    %c0_51 = arith.constant 0 : index
    %93 = vector.load %arg7[%c0_50, %c0_51] : memref<8x128xf32, #tpu.memory_space<vmem>>, vector<8x128xf32>
    tpu.vector_store %arg7[%c0_50, %c0_51], %92 {strides = array<i32>} : memref<8x128xf32, #tpu.memory_space<vmem>>, vector<8x128xf32>,
    return
  }
  func.func @transform_0(%arg0: i32) -> (i32, i32) {
    %c0_i32 = arith.constant 0 : i32
    %c0_i32_0 = arith.constant 0 : i32
    return %arg0, %c0_i32 : i32, i32
  }
  func.func @transform_1(%arg0: i32) -> (i32, i32) {
    %c0_i32 = arith.constant 0 : i32
    %c0_i32_0 = arith.constant 0 : i32
    %c0_i32_1 = arith.constant 0 : i32
    return %c0_i32, %c0_i32_0 : i32, i32
  }
  func.func @transform_2(%arg0: i32) -> (i32, i32, i32) {
    %c0_i32 = arith.constant 0 : i32
    %c0_i32_0 = arith.constant 0 : i32
    %c0_i32_1 = arith.constant 0 : i32
    %c0_i32_2 = arith.constant 0 : i32
    return %c0_i32, %c0_i32_0, %c0_i32_1 : i32, i32, i32
  }
  func.func @transform_3(%arg0: i32) -> (i32, i32) {
    %c0_i32 = arith.constant 0 : i32
    %c0_i32_0 = arith.constant 0 : i32
    %c0_i32_1 = arith.constant 0 : i32
    return %c0_i32, %c0_i32_0 : i32, i32
  }
  func.func @transform_4(%arg0: i32) -> (i32, i32) {
    %c0_i32 = arith.constant 0 : i32
    %c0_i32_0 = arith.constant 0 : i32
    %c0_i32_1 = arith.constant 0 : i32
    return %c0_i32, %c0_i32_0 : i32, i32
  }
  func.func @transform_5(%arg0: i32) -> (i32, i32) {
    %c0_i32 = arith.constant 0 : i32
    %c0_i32_0 = arith.constant 0 : i32
    %c0_i32_1 = arith.constant 0 : i32
    return %c0_i32, %c0_i32_0 : i32, i32
  }
  func.func @transform_6(%arg0: i32) -> (i32, i32) {
    %c0_i32 = arith.constant 0 : i32
    %c0_i32_0 = arith.constant 0 : i32
    return %arg0, %c0_i32 : i32, i32
  }
}

</mosaic_0001>

<llo_original>
// kernel: _mapping_forward.1
$region0: #{_mapping_forward.1}
  #allocation0 [shape = 'u32[]', space=smem, size = 0x4, offset = 0x4, fixed_abs, tag = 'smem constant byte address 0x4 - core index']
  #allocation1 [shape = 'u32[144,128]{1,0:T(1,128)}', space=vmem, size = 0x12000, scoped, tag = 'internal scratch']
  %s0 = inlined_call_operand.vmem [shape: f32[8,128], index: 0, kind: input, shape index: {}]
  %s1 = inlined_call_operand.hbm [shape: bf16[128,128], index: 1, kind: input, shape index: {}]
  %s2 = inlined_call_operand.hbm [shape: bf16[6,128,128], index: 2, kind: input, shape index: {}]
  %s3 = inlined_call_operand.hbm [shape: bf16[128,128], index: 3, kind: input, shape index: {}]
  %s4 = inlined_call_operand.vmem [shape: f32[7,128], index: 4, kind: input, shape index: {}]
  %s5 = inlined_call_operand.vmem [shape: f32[1,128], index: 5, kind: input, shape index: {}]
  %s6 = inlined_call_operand.hbm [shape: f32[8,128], index: 6, kind: output, shape index: {}]
  %s7 = sld [smem:[#allocation0]]
  $region46: #{_mapping_forward.1} parent=0
    _
  %s9 = ssub.s32 1, %s7
  %s10 = scalar_select 0, %s9, %s7
  $region1: #{_mapping_forward.1} parent=0
    #allocation2 [shape = 'u8[32768]{0}', space=vmem, size = 0x8000, scoped, tag = 'input window, operand 1, single buffered']
    #allocation3 [shape = 's32[1]{0}', space=sflag, size = 0x4, scoped, tag = 'scoped memory for _mapping_forward.1']
    #allocation4 [shape = 's32[1]{0}', space=sflag, size = 0x4, scoped, tag = 'scoped memory for _mapping_forward.1']
    #allocation5 [shape = 'u8[196608]{0}', space=vmem, size = 0x30000, scoped, tag = 'input window, operand 2, single buffered']
    #allocation6 [shape = 's32[1]{0}', space=sflag, size = 0x4, scoped, tag = 'scoped memory for _mapping_forward.1']
    #allocation7 [shape = 'u8[32768]{0}', space=vmem, size = 0x8000, scoped, tag = 'input window, operand 3, single buffered']
    #allocation8 [shape = 'u8[4096]{0}', space=vmem, size = 0x1000, scoped, tag = 'output window, operand 0, single buffered']
    %11 = vsyncpa [#allocation3], 0
    %12 = vsyncpa [#allocation6], 0
    %13 = vsyncpa [#allocation4], 0
    // Predicated region
    $region2: #{_mapping_forward.1} parent=1 // pred_check
      _
    $region3: #{_mapping_forward.1} parent=1 // pred_check_branch
      %15 = sbr.rel (0) target = $region5
    $region4: #{_mapping_forward.1} parent=1 // pred_region
      _
    $region5: #{_mapping_forward.1} parent=1 // pred_fallthru
      _
    // Predicated region
    $region6: #{_mapping_forward.1} parent=1 // pred_check
      _
    $region7: #{_mapping_forward.1} parent=1 // pred_check_branch
      %17 = sbr.rel (0) target = $region9
    $region8: #{_mapping_forward.1} parent=1 // pred_region
      %s19 = ssub.s32 1024, 1024
      %20 = vsyncadd [#allocation3], %s19
      %s21 = sshll.u32 [#allocation2], 4
      %s22 = int_to_ptr.vmem [resolvable:$true] %s21
      %27 = dma.hbm_to_vmem [thread:$0]  %s1, 1024, %s22, [#allocation3], 64, 64, 4
    $region9: #{_mapping_forward.1} parent=1 // pred_fallthru
      _
    // Predicated region
    $region10: #{_mapping_forward.1} parent=1 // pred_check
      _
    $region11: #{_mapping_forward.1} parent=1 // pred_check_branch
      %29 = sbr.rel (0) target = $region13
    $region12: #{_mapping_forward.1} parent=1 // pred_region
      %s31 = ssub.s32 6144, 6144
      %32 = vsyncadd [#allocation6], %s31
      %s33 = sshll.u32 [#allocation5], 4
      %s34 = int_to_ptr.vmem [resolvable:$true] %s33
      %39 = dma.hbm_to_vmem [thread:$0]  %s2, 6144, %s34, [#allocation6], 64, 64, 4
    $region13: #{_mapping_forward.1} parent=1 // pred_fallthru
      _
    // Predicated region
    $region14: #{_mapping_forward.1} parent=1 // pred_check
      _
    $region15: #{_mapping_forward.1} parent=1 // pred_check_branch
      %41 = sbr.rel (0) target = $region17
    $region16: #{_mapping_forward.1} parent=1 // pred_region
      %s43 = ssub.s32 1024, 1024
      %44 = vsyncadd [#allocation6], %s43
      %s45 = sshll.u32 [#allocation7], 4
      %s46 = int_to_ptr.vmem [resolvable:$true] %s45
      %51 = dma.hbm_to_vmem [thread:$0]  %s3, 1024, %s46, [#allocation6], 64, 64, 4
    $region17: #{_mapping_forward.1} parent=1 // pred_fallthru
      _
    // Predicated region
    $region18: #{_mapping_forward.1} parent=1 // pred_check
      _
    $region19: #{_mapping_forward.1} parent=1 // pred_check_branch
      %53 = sbr.rel (0) target = $region21
    $region20: #{_mapping_forward.1} parent=1 // pred_region
      _
    $region21: #{_mapping_forward.1} parent=1 // pred_fallthru
      _
    // Predicated region
    $region22: #{_mapping_forward.1} parent=1 // pred_check
      _
    $region23: #{_mapping_forward.1} parent=1 // pred_check_branch
      %55 = sbr.rel (0) target = $region25
    $region24: #{_mapping_forward.1} parent=1 // pred_region
      _
    $region25: #{_mapping_forward.1} parent=1 // pred_fallthru
      _
    // Predicated region
    $region26: #{_mapping_forward.1} parent=1 // pred_check
      _
    $region27: #{_mapping_forward.1} parent=1 // pred_check_branch
      %57 = sbr.rel (0) target = $region29
    $region28: #{_mapping_forward.1} parent=1 // pred_region
      %58 = dma.done [#allocation3], 1024
    $region29: #{_mapping_forward.1} parent=1 // pred_fallthru
      _
    // Predicated region
    $region30: #{_mapping_forward.1} parent=1 // pred_check
      _
    $region31: #{_mapping_forward.1} parent=1 // pred_check_branch
      %60 = sbr.rel (0) target = $region33
    $region32: #{_mapping_forward.1} parent=1 // pred_region
      %61 = dma.done [#allocation6], 6144
    $region33: #{_mapping_forward.1} parent=1 // pred_fallthru
      _
    // Predicated region
    $region34: #{_mapping_forward.1} parent=1 // pred_check
      _
    $region35: #{_mapping_forward.1} parent=1 // pred_check_branch
      %63 = sbr.rel (0) target = $region37
    $region36: #{_mapping_forward.1} parent=1 // pred_region
      %64 = dma.done [#allocation6], 1024
    $region37: #{_mapping_forward.1} parent=1 // pred_fallthru
      _
    %v67 = vld [vmem:[%s0] sm:$0xff]
    %v68 = vmul.f32 %v67, %v67
    %69 = vadd.xlane.f32.xlu0 %v68
    %v70 = vpop.xlane.xlu0 %69
    %v71 = vmul.f32 %v70, 0.03125
    %v72 = vadd.f32 %v71, 1e-08
    %v73 = vrsqrt.pop %v72
    %v74 = vmul.f32 %v67, %v73
    %v75 = vpack.c.bf16 %v74, %v74
    %v76 = vld [vmem:[#allocation2] sm:$0xf]
    %v77 = vld [vmem:[#allocation2 + $0x4] sm:$0xf]
    %v78 = vld [vmem:[#allocation2 + $0x8] sm:$0xf]
    %v79 = vld [vmem:[#allocation2 + $0xc] sm:$0xf]
    %v80 = vld [vmem:[#allocation2 + $0x10] sm:$0xf]
    %v81 = vld [vmem:[#allocation2 + $0x14] sm:$0xf]
    %v82 = vld [vmem:[#allocation2 + $0x18] sm:$0xf]
    %v83 = vld [vmem:[#allocation2 + $0x1c] sm:$0xf]
    %v84 = vld [vmem:[#allocation2 + $0x20] sm:$0xf]
    %v85 = vld [vmem:[#allocation2 + $0x24] sm:$0xf]
    %v86 = vld [vmem:[#allocation2 + $0x28] sm:$0xf]
    %v87 = vld [vmem:[#allocation2 + $0x2c] sm:$0xf]
    %v88 = vld [vmem:[#allocation2 + $0x30] sm:$0xf]
    %v89 = vld [vmem:[#allocation2 + $0x34] sm:$0xf]
    %v90 = vld [vmem:[#allocation2 + $0x38] sm:$0xf]
    %v91 = vld [vmem:[#allocation2 + $0x3c] sm:$0xf]
    %v92 = vld [vmem:[%s4] sm:$0x1]
    %v109 = vunpack.c.l.b16 %v76
    %v110 = vunpack.c.l.b16 %v77
    %v111 = vunpack.c.l.b16 %v78
    %v112 = vunpack.c.l.b16 %v79
    %v113 = vunpack.c.l.b16 %v80
    %v114 = vunpack.c.l.b16 %v81
    %v115 = vunpack.c.l.b16 %v82
    %v116 = vunpack.c.l.b16 %v83
    %v117 = vunpack.c.l.b16 %v84
    %v118 = vunpack.c.l.b16 %v85
    %v119 = vunpack.c.l.b16 %v86
    %v120 = vunpack.c.l.b16 %v87
    %v121 = vunpack.c.l.b16 %v88
    %v122 = vunpack.c.l.b16 %v89
    %v123 = vunpack.c.l.b16 %v90
    %v124 = vunpack.c.l.b16 %v91
    %v125 = vpack.c.b16 %v110, %v109
    %v126 = vpack.c.b16 %v112, %v111
    %v127 = vpack.c.b16 %v114, %v113
    %v128 = vpack.c.b16 %v116, %v115
    %v129 = vpack.c.b16 %v118, %v117
    %v130 = vpack.c.b16 %v120, %v119
    %v131 = vpack.c.b16 %v122, %v121
    %v132 = vpack.c.b16 %v124, %v123
    %141 = vmatprep.subr.bf16.mxu0 0
    %142 = vmatpush1.bf16.msra.mxu0 %v125
    %143 = vmatprep.subr.bf16.mxu0 0
    %144 = vmatpush1.bf16.msra.mxu0 %v126
    %145 = vmatprep.subr.bf16.mxu0 0
    %146 = vmatpush1.bf16.msra.mxu0 %v127
    %147 = vmatprep.subr.bf16.mxu0 0
    %148 = vmatpush1.bf16.msra.mxu0 %v128
    %149 = vmatprep.subr.bf16.mxu0 0
    %150 = vmatpush1.bf16.msra.mxu0 %v129
    %151 = vmatprep.subr.bf16.mxu0 0
    %152 = vmatpush1.bf16.msra.mxu0 %v130
    %153 = vmatprep.subr.bf16.mxu0 0
    %154 = vmatpush1.bf16.msra.mxu0 %v131
    %155 = vmatprep.subr.bf16.mxu0 0
    %156 = vmatpush1.bf16.msra.mxu0 %v132
    %157 = vmatprep.subr.bf16.mxu0 0
    %158 = vmatpush1.bf16.msra.mxu0 0
    %159 = vmatprep.subr.bf16.mxu0 0
    %160 = vmatpush1.bf16.msra.mxu0 0
    %161 = vmatprep.subr.bf16.mxu0 0
    %162 = vmatpush1.bf16.msra.mxu0 0
    %163 = vmatprep.subr.bf16.mxu0 0
    %164 = vmatpush1.bf16.msra.mxu0 0
    %165 = vmatprep.subr.bf16.mxu0 0
    %166 = vmatpush1.bf16.msra.mxu0 0
    %167 = vmatprep.subr.bf16.mxu0 0
    %168 = vmatpush1.bf16.msra.mxu0 0
    %169 = vmatprep.subr.bf16.mxu0 0
    %170 = vmatpush1.bf16.msra.mxu0 0
    %171 = vmatprep.subr.bf16.mxu0 0
    %172 = vmatpush1.bf16.msra.mxu0 0
    %173 = vmatprep.mubr.bf16.mxu0 0
    %174 = vmatmul.mubr.bf16.gmra.mrb[0].mxu0 %v75
    %v175 = vpop.f32.mrb[0].mxu0
    %v176 = vadd.f32 0.0, %v175
    %v177 = vpop.f32.mrb[0].mxu0
    %v178 = vpop.f32.mrb[0].mxu0
    %v179 = vpop.f32.mrb[0].mxu0
    %180 = vdwg.mxu0
    %v181 = vpack.c.bf16 %v176, %v176
    %v182 = vpack.c.bf16 %v92, %v92
    %v184 = vpack.i.b16 %v182, %v182
    %v186 = vlaneseq
    %v187 = vshrl.u32 %v186, 7
    %v188 = vsub.s32 0, %v187
    %v189 = vrot.slane %v184, %v188
    %v190 = vadd.bf16 %v181, %v189
    %v191 = vmul.bf16 %v190, 1045249613
    %v192 = vmax.bf16 %v190, %v191
    %v193 = vld [vmem:[#allocation5] sm:$0xf]
    %v194 = vld [vmem:[#allocation5 + $0x4] sm:$0xf]
    %v195 = vld [vmem:[#allocation5 + $0x8] sm:$0xf]
    %v196 = vld [vmem:[#allocation5 + $0xc] sm:$0xf]
    %v197 = vld [vmem:[#allocation5 + $0x10] sm:$0xf]
    %v198 = vld [vmem:[#allocation5 + $0x14] sm:$0xf]
    %v199 = vld [vmem:[#allocation5 + $0x18] sm:$0xf]
    %v200 = vld [vmem:[#allocation5 + $0x1c] sm:$0xf]
    %v201 = vld [vmem:[#allocation5 + $0x20] sm:$0xf]
    %v202 = vld [vmem:[#allocation5 + $0x24] sm:$0xf]
    %v203 = vld [vmem:[#allocation5 + $0x28] sm:$0xf]
    %v204 = vld [vmem:[#allocation5 + $0x2c] sm:$0xf]
    %v205 = vld [vmem:[#allocation5 + $0x30] sm:$0xf]
    %v206 = vld [vmem:[#allocation5 + $0x34] sm:$0xf]
    %v207 = vld [vmem:[#allocation5 + $0x38] sm:$0xf]
    %v208 = vld [vmem:[#allocation5 + $0x3c] sm:$0xf]
    %v209 = vld [vmem:[%s4 + $0x1] sm:$0x1]
    %v226 = vunpack.c.l.b16 %v193
    %v227 = vunpack.c.l.b16 %v194
    %v228 = vunpack.c.l.b16 %v195
    %v229 = vunpack.c.l.b16 %v196
    %v230 = vunpack.c.l.b16 %v197
    %v231 = vunpack.c.l.b16 %v198
    %v232 = vunpack.c.l.b16 %v199
    %v233 = vunpack.c.l.b16 %v200
    %v234 = vunpack.c.l.b16 %v201
    %v235 = vunpack.c.l.b16 %v202
    %v236 = vunpack.c.l.b16 %v203
    %v237 = vunpack.c.l.b16 %v204
    %v238 = vunpack.c.l.b16 %v205
    %v239 = vunpack.c.l.b16 %v206
    %v240 = vunpack.c.l.b16 %v207
    %v241 = vunpack.c.l.b16 %v208
    %v242 = vpack.c.b16 %v227, %v226
    %v243 = vpack.c.b16 %v229, %v228
    %v244 = vpack.c.b16 %v231, %v230
    %v245 = vpack.c.b16 %v233, %v232
    %v246 = vpack.c.b16 %v235, %v234
    %v247 = vpack.c.b16 %v237, %v236
    %v248 = vpack.c.b16 %v239, %v238
    %v249 = vpack.c.b16 %v241, %v240
    %258 = vmatprep.subr.bf16.mxu0 0
    %259 = vmatpush1.bf16.msra.mxu0 %v242
    %260 = vmatprep.subr.bf16.mxu0 0
    %261 = vmatpush1.bf16.msra.mxu0 %v243
    %262 = vmatprep.subr.bf16.mxu0 0
    %263 = vmatpush1.bf16.msra.mxu0 %v244
    %264 = vmatprep.subr.bf16.mxu0 0
    %265 = vmatpush1.bf16.msra.mxu0 %v245
    %266 = vmatprep.subr.bf16.mxu0 0
    %267 = vmatpush1.bf16.msra.mxu0 %v246
    %268 = vmatprep.subr.bf16.mxu0 0
    %269 = vmatpush1.bf16.msra.mxu0 %v247
    %270 = vmatprep.subr.bf16.mxu0 0
    %271 = vmatpush1.bf16.msra.mxu0 %v248
    %272 = vmatprep.subr.bf16.mxu0 0
    %273 = vmatpush1.bf16.msra.mxu0 %v249
    %274 = vmatprep.subr.bf16.mxu0 0
    %275 = vmatpush1.bf16.msra.mxu0 0
    %276 = vmatprep.subr.bf16.mxu0 0
    %277 = vmatpush1.bf16.msra.mxu0 0
    %278 = vmatprep.subr.bf16.mxu0 0
    %279 = vmatpush1.bf16.msra.mxu0 0
    %280 = vmatprep.subr.bf16.mxu0 0
    %281 = vmatpush1.bf16.msra.mxu0 0
    %282 = vmatprep.subr.bf16.mxu0 0
    %283 = vmatpush1.bf16.msra.mxu0 0
    %284 = vmatprep.subr.bf16.mxu0 0
    %285 = vmatpush1.bf16.msra.mxu0 0
    %286 = vmatprep.subr.bf16.mxu0 0
    %287 = vmatpush1.bf16.msra.mxu0 0
    %288 = vmatprep.subr.bf16.mxu0 0
    %289 = vmatpush1.bf16.msra.mxu0 0
    %290 = vmatprep.mubr.bf16.mxu0 0
    %291 = vmatmul.mubr.bf16.gmra.mrb[0].mxu0 %v192
    %v292 = vpop.f32.mrb[0].mxu0
    %v293 = vadd.f32 0.0, %v292
    %v294 = vpop.f32.mrb[0].mxu0
    %v295 = vpop.f32.mrb[0].mxu0
    %v296 = vpop.f32.mrb[0].mxu0
    %297 = vdwg.mxu0
    %v298 = vpack.c.bf16 %v293, %v293
    %v299 = vpack.c.bf16 %v209, %v209
    %v301 = vpack.i.b16 %v299, %v299
    %v303 = vlaneseq
    %v304 = vshrl.u32 %v303, 7
    %v305 = vsub.s32 0, %v304
    %v306 = vrot.slane %v301, %v305
    %v307 = vadd.bf16 %v298, %v306
    %v308 = vmul.bf16 %v307, 1045249613
    %v309 = vmax.bf16 %v307, %v308
    %s310 = scalar_lea.vmem [#allocation5], 64
    %v311 = vld [vmem:[%s310] sm:$0xf]
    %v312 = vld [vmem:[%s310 + $0x4] sm:$0xf]
    %v313 = vld [vmem:[%s310 + $0x8] sm:$0xf]
    %v314 = vld [vmem:[%s310 + $0xc] sm:$0xf]
    %v315 = vld [vmem:[%s310 + $0x10] sm:$0xf]
    %v316 = vld [vmem:[%s310 + $0x14] sm:$0xf]
    %v317 = vld [vmem:[%s310 + $0x18] sm:$0xf]
    %v318 = vld [vmem:[%s310 + $0x1c] sm:$0xf]
    %v319 = vld [vmem:[%s310 + $0x20] sm:$0xf]
    %v320 = vld [vmem:[%s310 + $0x24] sm:$0xf]
    %v321 = vld [vmem:[%s310 + $0x28] sm:$0xf]
    %v322 = vld [vmem:[%s310 + $0x2c] sm:$0xf]
    %v323 = vld [vmem:[%s310 + $0x30] sm:$0xf]
    %v324 = vld [vmem:[%s310 + $0x34] sm:$0xf]
    %v325 = vld [vmem:[%s310 + $0x38] sm:$0xf]
    %v326 = vld [vmem:[%s310 + $0x3c] sm:$0xf]
    %v327 = vld [vmem:[%s4 + $0x2] sm:$0x1]
    %v344 = vunpack.c.l.b16 %v311
    %v345 = vunpack.c.l.b16 %v312
    %v346 = vunpack.c.l.b16 %v313
    %v347 = vunpack.c.l.b16 %v314
    %v348 = vunpack.c.l.b16 %v315
    %v349 = vunpack.c.l.b16 %v316
    %v350 = vunpack.c.l.b16 %v317
    %v351 = vunpack.c.l.b16 %v318
    %v352 = vunpack.c.l.b16 %v319
    %v353 = vunpack.c.l.b16 %v320
    %v354 = vunpack.c.l.b16 %v321
    %v355 = vunpack.c.l.b16 %v322
    %v356 = vunpack.c.l.b16 %v323
    %v357 = vunpack.c.l.b16 %v324
    %v358 = vunpack.c.l.b16 %v325
    %v359 = vunpack.c.l.b16 %v326
    %v360 = vpack.c.b16 %v345, %v344
    %v361 = vpack.c.b16 %v347, %v346
    %v362 = vpack.c.b16 %v349, %v348
    %v363 = vpack.c.b16 %v351, %v350
    %v364 = vpack.c.b16 %v353, %v352
    %v365 = vpack.c.b16 %v355, %v354
    %v366 = vpack.c.b16 %v357, %v356
    %v367 = vpack.c.b16 %v359, %v358
    %376 = vmatprep.subr.bf16.mxu0 0
    %377 = vmatpush1.bf16.msra.mxu0 %v360
    %378 = vmatprep.subr.bf16.mxu0 0
    %379 = vmatpush1.bf16.msra.mxu0 %v361
    %380 = vmatprep.subr.bf16.mxu0 0
    %381 = vmatpush1.bf16.msra.mxu0 %v362
    %382 = vmatprep.subr.bf16.mxu0 0
    %383 = vmatpush1.bf16.msra.mxu0 %v363
    %384 = vmatprep.subr.bf16.mxu0 0
    %385 = vmatpush1.bf16.msra.mxu0 %v364
    %386 = vmatprep.subr.bf16.mxu0 0
    %387 = vmatpush1.bf16.msra.mxu0 %v365
    %388 = vmatprep.subr.bf16.mxu0 0
    %389 = vmatpush1.bf16.msra.mxu0 %v366
    %390 = vmatprep.subr.bf16.mxu0 0
    %391 = vmatpush1.bf16.msra.mxu0 %v367
    %392 = vmatprep.subr.bf16.mxu0 0
    %393 = vmatpush1.bf16.msra.mxu0 0
    %394 = vmatprep.subr.bf16.mxu0 0
    %395 = vmatpush1.bf16.msra.mxu0 0
    %396 = vmatprep.subr.bf16.mxu0 0
    %397 = vmatpush1.bf16.msra.mxu0 0
    %398 = vmatprep.subr.bf16.mxu0 0
    %399 = vmatpush1.bf16.msra.mxu0 0
    %400 = vmatprep.subr.bf16.mxu0 0
    %401 = vmatpush1.bf16.msra.mxu0 0
    %402 = vmatprep.subr.bf16.mxu0 0
    %403 = vmatpush1.bf16.msra.mxu0 0
    %404 = vmatprep.subr.bf16.mxu0 0
    %405 = vmatpush1.bf16.msra.mxu0 0
    %406 = vmatprep.subr.bf16.mxu0 0
    %407 = vmatpush1.bf16.msra.mxu0 0
    %408 = vmatprep.mubr.bf16.mxu0 0
    %409 = vmatmul.mubr.bf16.gmra.mrb[0].mxu0 %v309
    %v410 = vpop.f32.mrb[0].mxu0
    %v411 = vadd.f32 0.0, %v410
    %v412 = vpop.f32.mrb[0].mxu0
    %v413 = vpop.f32.mrb[0].mxu0
    %v414 = vpop.f32.mrb[0].mxu0
    %415 = vdwg.mxu0
    %v416 = vpack.c.bf16 %v411, %v411
    %v417 = vpack.c.bf16 %v327, %v327
    %v419 = vpack.i.b16 %v417, %v417
    %v421 = vlaneseq
    %v422 = vshrl.u32 %v421, 7
    %v423 = vsub.s32 0, %v422
    %v424 = vrot.slane %v419, %v423
    %v425 = vadd.bf16 %v416, %v424
    %v426 = vmul.bf16 %v425, 1045249613
    %v427 = vmax.bf16 %v425, %v426
    %s428 = scalar_lea.vmem [#allocation5], 128
    %v429 = vld [vmem:[%s428] sm:$0xf]
    %v430 = vld [vmem:[%s428 + $0x4] sm:$0xf]
    %v431 = vld [vmem:[%s428 + $0x8] sm:$0xf]
    %v432 = vld [vmem:[%s428 + $0xc] sm:$0xf]
    %v433 = vld [vmem:[%s428 + $0x10] sm:$0xf]
    %v434 = vld [vmem:[%s428 + $0x14] sm:$0xf]
    %v435 = vld [vmem:[%s428 + $0x18] sm:$0xf]
    %v436 = vld [vmem:[%s428 + $0x1c] sm:$0xf]
    %v437 = vld [vmem:[%s428 + $0x20] sm:$0xf]
    %v438 = vld [vmem:[%s428 + $0x24] sm:$0xf]
    %v439 = vld [vmem:[%s428 + $0x28] sm:$0xf]
    %v440 = vld [vmem:[%s428 + $0x2c] sm:$0xf]
    %v441 = vld [vmem:[%s428 + $0x30] sm:$0xf]
    %v442 = vld [vmem:[%s428 + $0x34] sm:$0xf]
    %v443 = vld [vmem:[%s428 + $0x38] sm:$0xf]
    %v444 = vld [vmem:[%s428 + $0x3c] sm:$0xf]
    %v445 = vld [vmem:[%s4 + $0x3] sm:$0x1]
    %v462 = vunpack.c.l.b16 %v429
    %v463 = vunpack.c.l.b16 %v430
    %v464 = vunpack.c.l.b16 %v431
    %v465 = vunpack.c.l.b16 %v432
    %v466 = vunpack.c.l.b16 %v433
    %v467 = vunpack.c.l.b16 %v434
    %v468 = vunpack.c.l.b16 %v435
    %v469 = vunpack.c.l.b16 %v436
    %v470 = vunpack.c.l.b16 %v437
    %v471 = vunpack.c.l.b16 %v438
    %v472 = vunpack.c.l.b16 %v439
    %v473 = vunpack.c.l.b16 %v440
    %v474 = vunpack.c.l.b16 %v441
    %v475 = vunpack.c.l.b16 %v442
    %v476 = vunpack.c.l.b16 %v443
    %v477 = vunpack.c.l.b16 %v444
    %v478 = vpack.c.b16 %v463, %v462
    %v479 = vpack.c.b16 %v465, %v464
    %v480 = vpack.c.b16 %v467, %v466
    %v481 = vpack.c.b16 %v469, %v468
    %v482 = vpack.c.b16 %v471, %v470
    %v483 = vpack.c.b16 %v473, %v472
    %v484 = vpack.c.b16 %v475, %v474
    %v485 = vpack.c.b16 %v477, %v476
    %494 = vmatprep.subr.bf16.mxu0 0
    %495 = vmatpush1.bf16.msra.mxu0 %v478
    %496 = vmatprep.subr.bf16.mxu0 0
    %497 = vmatpush1.bf16.msra.mxu0 %v479
    %498 = vmatprep.subr.bf16.mxu0 0
    %499 = vmatpush1.bf16.msra.mxu0 %v480
    %500 = vmatprep.subr.bf16.mxu0 0
    %501 = vmatpush1.bf16.msra.mxu0 %v481
    %502 = vmatprep.subr.bf16.mxu0 0
    %503 = vmatpush1.bf16.msra.mxu0 %v482
    %504 = vmatprep.subr.bf16.mxu0 0
    %505 = vmatpush1.bf16.msra.mxu0 %v483
    %506 = vmatprep.subr.bf16.mxu0 0
    %507 = vmatpush1.bf16.msra.mxu0 %v484
    %508 = vmatprep.subr.bf16.mxu0 0
    %509 = vmatpush1.bf16.msra.mxu0 %v485
    %510 = vmatprep.subr.bf16.mxu0 0
    %511 = vmatpush1.bf16.msra.mxu0 0
    %512 = vmatprep.subr.bf16.mxu0 0
    %513 = vmatpush1.bf16.msra.mxu0 0
    %514 = vmatprep.subr.bf16.mxu0 0
    %515 = vmatpush1.bf16.msra.mxu0 0
    %516 = vmatprep.subr.bf16.mxu0 0
    %517 = vmatpush1.bf16.msra.mxu0 0
    %518 = vmatprep.subr.bf16.mxu0 0
    %519 = vmatpush1.bf16.msra.mxu0 0
    %520 = vmatprep.subr.bf16.mxu0 0
    %521 = vmatpush1.bf16.msra.mxu0 0
    %522 = vmatprep.subr.bf16.mxu0 0
    %523 = vmatpush1.bf16.msra.mxu0 0
    %524 = vmatprep.subr.bf16.mxu0 0
    %525 = vmatpush1.bf16.msra.mxu0 0
    %526 = vmatprep.mubr.bf16.mxu0 0
    %527 = vmatmul.mubr.bf16.gmra.mrb[0].mxu0 %v427
    %v528 = vpop.f32.mrb[0].mxu0
    %v529 = vadd.f32 0.0, %v528
    %v530 = vpop.f32.mrb[0].mxu0
    %v531 = vpop.f32.mrb[0].mxu0
    %v532 = vpop.f32.mrb[0].mxu0
    %533 = vdwg.mxu0
    %v534 = vpack.c.bf16 %v529, %v529
    %v535 = vpack.c.bf16 %v445, %v445
    %v537 = vpack.i.b16 %v535, %v535
    %v539 = vlaneseq
    %v540 = vshrl.u32 %v539, 7
    %v541 = vsub.s32 0, %v540
    %v542 = vrot.slane %v537, %v541
    %v543 = vadd.bf16 %v534, %v542
    %v544 = vmul.bf16 %v543, 1045249613
    %v545 = vmax.bf16 %v543, %v544
    %s546 = scalar_lea.vmem [#allocation5], 192
    %v547 = vld [vmem:[%s546] sm:$0xf]
    %v548 = vld [vmem:[%s546 + $0x4] sm:$0xf]
    %v549 = vld [vmem:[%s546 + $0x8] sm:$0xf]
    %v550 = vld [vmem:[%s546 + $0xc] sm:$0xf]
    %v551 = vld [vmem:[%s546 + $0x10] sm:$0xf]
    %v552 = vld [vmem:[%s546 + $0x14] sm:$0xf]
    %v553 = vld [vmem:[%s546 + $0x18] sm:$0xf]
    %v554 = vld [vmem:[%s546 + $0x1c] sm:$0xf]
    %v555 = vld [vmem:[%s546 + $0x20] sm:$0xf]
    %v556 = vld [vmem:[%s546 + $0x24] sm:$0xf]
    %v557 = vld [vmem:[%s546 + $0x28] sm:$0xf]
    %v558 = vld [vmem:[%s546 + $0x2c] sm:$0xf]
    %v559 = vld [vmem:[%s546 + $0x30] sm:$0xf]
    %v560 = vld [vmem:[%s546 + $0x34] sm:$0xf]
    %v561 = vld [vmem:[%s546 + $0x38] sm:$0xf]
    %v562 = vld [vmem:[%s546 + $0x3c] sm:$0xf]
    %v563 = vld [vmem:[%s4 + $0x4] sm:$0x1]
    %v580 = vunpack.c.l.b16 %v547
    %v581 = vunpack.c.l.b16 %v548
    %v582 = vunpack.c.l.b16 %v549
    %v583 = vunpack.c.l.b16 %v550
    %v584 = vunpack.c.l.b16 %v551
    %v585 = vunpack.c.l.b16 %v552
    %v586 = vunpack.c.l.b16 %v553
    %v587 = vunpack.c.l.b16 %v554
    %v588 = vunpack.c.l.b16 %v555
    %v589 = vunpack.c.l.b16 %v556
    %v590 = vunpack.c.l.b16 %v557
    %v591 = vunpack.c.l.b16 %v558
    %v592 = vunpack.c.l.b16 %v559
    %v593 = vunpack.c.l.b16 %v560
    %v594 = vunpack.c.l.b16 %v561
    %v595 = vunpack.c.l.b16 %v562
    %v596 = vpack.c.b16 %v581, %v580
    %v597 = vpack.c.b16 %v583, %v582
    %v598 = vpack.c.b16 %v585, %v584
    %v599 = vpack.c.b16 %v587, %v586
    %v600 = vpack.c.b16 %v589, %v588
    %v601 = vpack.c.b16 %v591, %v590
    %v602 = vpack.c.b16 %v593, %v592
    %v603 = vpack.c.b16 %v595, %v594
    %612 = vmatprep.subr.bf16.mxu0 0
    %613 = vmatpush1.bf16.msra.mxu0 %v596
    %614 = vmatprep.subr.bf16.mxu0 0
    %615 = vmatpush1.bf16.msra.mxu0 %v597
    %616 = vmatprep.subr.bf16.mxu0 0
    %617 = vmatpush1.bf16.msra.mxu0 %v598
    %618 = vmatprep.subr.bf16.mxu0 0
    %619 = vmatpush1.bf16.msra.mxu0 %v599
    %620 = vmatprep.subr.bf16.mxu0 0
    %621 = vmatpush1.bf16.msra.mxu0 %v600
    %622 = vmatprep.subr.bf16.mxu0 0
    %623 = vmatpush1.bf16.msra.mxu0 %v601
    %624 = vmatprep.subr.bf16.mxu0 0
    %625 = vmatpush1.bf16.msra.mxu0 %v602
    %626 = vmatprep.subr.bf16.mxu0 0
    %627 = vmatpush1.bf16.msra.mxu0 %v603
    %628 = vmatprep.subr.bf16.mxu0 0
    %629 = vmatpush1.bf16.msra.mxu0 0
    %630 = vmatprep.subr.bf16.mxu0 0
    %631 = vmatpush1.bf16.msra.mxu0 0
    %632 = vmatprep.subr.bf16.mxu0 0
    %633 = vmatpush1.bf16.msra.mxu0 0
    %634 = vmatprep.subr.bf16.mxu0 0
    %635 = vmatpush1.bf16.msra.mxu0 0
    %636 = vmatprep.subr.bf16.mxu0 0
    %637 = vmatpush1.bf16.msra.mxu0 0
    %638 = vmatprep.subr.bf16.mxu0 0
    %639 = vmatpush1.bf16.msra.mxu0 0
    %640 = vmatprep.subr.bf16.mxu0 0
    %641 = vmatpush1.bf16.msra.mxu0 0
    %642 = vmatprep.subr.bf16.mxu0 0
    %643 = vmatpush1.bf16.msra.mxu0 0
    %644 = vmatprep.mubr.bf16.mxu0 0
    %645 = vmatmul.mubr.bf16.gmra.mrb[0].mxu0 %v545
    %v646 = vpop.f32.mrb[0].mxu0
    %v647 = vadd.f32 0.0, %v646
    %v648 = vpop.f32.mrb[0].mxu0
    %v649 = vpop.f32.mrb[0].mxu0
    %v650 = vpop.f32.mrb[0].mxu0
    %651 = vdwg.mxu0
    %v652 = vpack.c.bf16 %v647, %v647
    %v653 = vpack.c.bf16 %v563, %v563
    %v655 = vpack.i.b16 %v653, %v653
    %v657 = vlaneseq
    %v658 = vshrl.u32 %v657, 7
    %v659 = vsub.s32 0, %v658
    %v660 = vrot.slane %v655, %v659
    %v661 = vadd.bf16 %v652, %v660
    %v662 = vmul.bf16 %v661, 1045249613
    %v663 = vmax.bf16 %v661, %v662
    %s664 = scalar_lea.vmem [#allocation5], 256
    %v665 = vld [vmem:[%s664] sm:$0xf]
    %v666 = vld [vmem:[%s664 + $0x4] sm:$0xf]
    %v667 = vld [vmem:[%s664 + $0x8] sm:$0xf]
    %v668 = vld [vmem:[%s664 + $0xc] sm:$0xf]
    %v669 = vld [vmem:[%s664 + $0x10] sm:$0xf]
    %v670 = vld [vmem:[%s664 + $0x14] sm:$0xf]
    %v671 = vld [vmem:[%s664 + $0x18] sm:$0xf]
    %v672 = vld [vmem:[%s664 + $0x1c] sm:$0xf]
    %v673 = vld [vmem:[%s664 + $0x20] sm:$0xf]
    %v674 = vld [vmem:[%s664 + $0x24] sm:$0xf]
    %v675 = vld [vmem:[%s664 + $0x28] sm:$0xf]
    %v676 = vld [vmem:[%s664 + $0x2c] sm:$0xf]
    %v677 = vld [vmem:[%s664 + $0x30] sm:$0xf]
    %v678 = vld [vmem:[%s664 + $0x34] sm:$0xf]
    %v679 = vld [vmem:[%s664 + $0x38] sm:$0xf]
    %v680 = vld [vmem:[%s664 + $0x3c] sm:$0xf]
    %v681 = vld [vmem:[%s4 + $0x5] sm:$0x1]
    %v698 = vunpack.c.l.b16 %v665
    %v699 = vunpack.c.l.b16 %v666
    %v700 = vunpack.c.l.b16 %v667
    %v701 = vunpack.c.l.b16 %v668
    %v702 = vunpack.c.l.b16 %v669
    %v703 = vunpack.c.l.b16 %v670
    %v704 = vunpack.c.l.b16 %v671
    %v705 = vunpack.c.l.b16 %v672
    %v706 = vunpack.c.l.b16 %v673
    %v707 = vunpack.c.l.b16 %v674
    %v708 = vunpack.c.l.b16 %v675
    %v709 = vunpack.c.l.b16 %v676
    %v710 = vunpack.c.l.b16 %v677
    %v711 = vunpack.c.l.b16 %v678
    %v712 = vunpack.c.l.b16 %v679
    %v713 = vunpack.c.l.b16 %v680
    %v714 = vpack.c.b16 %v699, %v698
    %v715 = vpack.c.b16 %v701, %v700
    %v716 = vpack.c.b16 %v703, %v702
    %v717 = vpack.c.b16 %v705, %v704
    %v718 = vpack.c.b16 %v707, %v706
    %v719 = vpack.c.b16 %v709, %v708
    %v720 = vpack.c.b16 %v711, %v710
    %v721 = vpack.c.b16 %v713, %v712
    %730 = vmatprep.subr.bf16.mxu0 0
    %731 = vmatpush1.bf16.msra.mxu0 %v714
    %732 = vmatprep.subr.bf16.mxu0 0
    %733 = vmatpush1.bf16.msra.mxu0 %v715
    %734 = vmatprep.subr.bf16.mxu0 0
    %735 = vmatpush1.bf16.msra.mxu0 %v716
    %736 = vmatprep.subr.bf16.mxu0 0
    %737 = vmatpush1.bf16.msra.mxu0 %v717
    %738 = vmatprep.subr.bf16.mxu0 0
    %739 = vmatpush1.bf16.msra.mxu0 %v718
    %740 = vmatprep.subr.bf16.mxu0 0
    %741 = vmatpush1.bf16.msra.mxu0 %v719
    %742 = vmatprep.subr.bf16.mxu0 0
    %743 = vmatpush1.bf16.msra.mxu0 %v720
    %744 = vmatprep.subr.bf16.mxu0 0
    %745 = vmatpush1.bf16.msra.mxu0 %v721
    %746 = vmatprep.subr.bf16.mxu0 0
    %747 = vmatpush1.bf16.msra.mxu0 0
    %748 = vmatprep.subr.bf16.mxu0 0
    %749 = vmatpush1.bf16.msra.mxu0 0
    %750 = vmatprep.subr.bf16.mxu0 0
    %751 = vmatpush1.bf16.msra.mxu0 0
    %752 = vmatprep.subr.bf16.mxu0 0
    %753 = vmatpush1.bf16.msra.mxu0 0
    %754 = vmatprep.subr.bf16.mxu0 0
    %755 = vmatpush1.bf16.msra.mxu0 0
    %756 = vmatprep.subr.bf16.mxu0 0
    %757 = vmatpush1.bf16.msra.mxu0 0
    %758 = vmatprep.subr.bf16.mxu0 0
    %759 = vmatpush1.bf16.msra.mxu0 0
    %760 = vmatprep.subr.bf16.mxu0 0
    %761 = vmatpush1.bf16.msra.mxu0 0
    %762 = vmatprep.mubr.bf16.mxu0 0
    %763 = vmatmul.mubr.bf16.gmra.mrb[0].mxu0 %v663
    %v764 = vpop.f32.mrb[0].mxu0
    %v765 = vadd.f32 0.0, %v764
    %v766 = vpop.f32.mrb[0].mxu0
    %v767 = vpop.f32.mrb[0].mxu0
    %v768 = vpop.f32.mrb[0].mxu0
    %769 = vdwg.mxu0
    %v770 = vpack.c.bf16 %v765, %v765
    %v771 = vpack.c.bf16 %v681, %v681
    %v773 = vpack.i.b16 %v771, %v771
    %v775 = vlaneseq
    %v776 = vshrl.u32 %v775, 7
    %v777 = vsub.s32 0, %v776
    %v778 = vrot.slane %v773, %v777
    %v779 = vadd.bf16 %v770, %v778
    %v780 = vmul.bf16 %v779, 1045249613
    %v781 = vmax.bf16 %v779, %v780
    %s782 = scalar_lea.vmem [#allocation5], 320
    %v783 = vld [vmem:[%s782] sm:$0xf]
    %v784 = vld [vmem:[%s782 + $0x4] sm:$0xf]
    %v785 = vld [vmem:[%s782 + $0x8] sm:$0xf]
    %v786 = vld [vmem:[%s782 + $0xc] sm:$0xf]
    %v787 = vld [vmem:[%s782 + $0x10] sm:$0xf]
    %v788 = vld [vmem:[%s782 + $0x14] sm:$0xf]
    %v789 = vld [vmem:[%s782 + $0x18] sm:$0xf]
    %v790 = vld [vmem:[%s782 + $0x1c] sm:$0xf]
    %v791 = vld [vmem:[%s782 + $0x20] sm:$0xf]
    %v792 = vld [vmem:[%s782 + $0x24] sm:$0xf]
    %v793 = vld [vmem:[%s782 + $0x28] sm:$0xf]
    %v794 = vld [vmem:[%s782 + $0x2c] sm:$0xf]
    %v795 = vld [vmem:[%s782 + $0x30] sm:$0xf]
    %v796 = vld [vmem:[%s782 + $0x34] sm:$0xf]
    %v797 = vld [vmem:[%s782 + $0x38] sm:$0xf]
    %v798 = vld [vmem:[%s782 + $0x3c] sm:$0xf]
    %v799 = vld [vmem:[%s4 + $0x6] sm:$0x1]
    %v816 = vunpack.c.l.b16 %v783
    %v817 = vunpack.c.l.b16 %v784
    %v818 = vunpack.c.l.b16 %v785
    %v819 = vunpack.c.l.b16 %v786
    %v820 = vunpack.c.l.b16 %v787
    %v821 = vunpack.c.l.b16 %v788
    %v822 = vunpack.c.l.b16 %v789
    %v823 = vunpack.c.l.b16 %v790
    %v824 = vunpack.c.l.b16 %v791
    %v825 = vunpack.c.l.b16 %v792
    %v826 = vunpack.c.l.b16 %v793
    %v827 = vunpack.c.l.b16 %v794
    %v828 = vunpack.c.l.b16 %v795
    %v829 = vunpack.c.l.b16 %v796
    %v830 = vunpack.c.l.b16 %v797
    %v831 = vunpack.c.l.b16 %v798
    %v832 = vpack.c.b16 %v817, %v816
    %v833 = vpack.c.b16 %v819, %v818
    %v834 = vpack.c.b16 %v821, %v820
    %v835 = vpack.c.b16 %v823, %v822
    %v836 = vpack.c.b16 %v825, %v824
    %v837 = vpack.c.b16 %v827, %v826
    %v838 = vpack.c.b16 %v829, %v828
    %v839 = vpack.c.b16 %v831, %v830
    %848 = vmatprep.subr.bf16.mxu0 0
    %849 = vmatpush1.bf16.msra.mxu0 %v832
    %850 = vmatprep.subr.bf16.mxu0 0
    %851 = vmatpush1.bf16.msra.mxu0 %v833
    %852 = vmatprep.subr.bf16.mxu0 0
    %853 = vmatpush1.bf16.msra.mxu0 %v834
    %854 = vmatprep.subr.bf16.mxu0 0
    %855 = vmatpush1.bf16.msra.mxu0 %v835
    %856 = vmatprep.subr.bf16.mxu0 0
    %857 = vmatpush1.bf16.msra.mxu0 %v836
    %858 = vmatprep.subr.bf16.mxu0 0
    %859 = vmatpush1.bf16.msra.mxu0 %v837
    %860 = vmatprep.subr.bf16.mxu0 0
    %861 = vmatpush1.bf16.msra.mxu0 %v838
    %862 = vmatprep.subr.bf16.mxu0 0
    %863 = vmatpush1.bf16.msra.mxu0 %v839
    %864 = vmatprep.subr.bf16.mxu0 0
    %865 = vmatpush1.bf16.msra.mxu0 0
    %866 = vmatprep.subr.bf16.mxu0 0
    %867 = vmatpush1.bf16.msra.mxu0 0
    %868 = vmatprep.subr.bf16.mxu0 0
    %869 = vmatpush1.bf16.msra.mxu0 0
    %870 = vmatprep.subr.bf16.mxu0 0
    %871 = vmatpush1.bf16.msra.mxu0 0
    %872 = vmatprep.subr.bf16.mxu0 0
    %873 = vmatpush1.bf16.msra.mxu0 0
    %874 = vmatprep.subr.bf16.mxu0 0
    %875 = vmatpush1.bf16.msra.mxu0 0
    %876 = vmatprep.subr.bf16.mxu0 0
    %877 = vmatpush1.bf16.msra.mxu0 0
    %878 = vmatprep.subr.bf16.mxu0 0
    %879 = vmatpush1.bf16.msra.mxu0 0
    %880 = vmatprep.mubr.bf16.mxu0 0
    %881 = vmatmul.mubr.bf16.gmra.mrb[0].mxu0 %v781
    %v882 = vpop.f32.mrb[0].mxu0
    %v883 = vadd.f32 0.0, %v882
    %v884 = vpop.f32.mrb[0].mxu0
    %v885 = vpop.f32.mrb[0].mxu0
    %v886 = vpop.f32.mrb[0].mxu0
    %887 = vdwg.mxu0
    %v888 = vpack.c.bf16 %v883, %v883
    %v889 = vpack.c.bf16 %v799, %v799
    %v891 = vpack.i.b16 %v889, %v889
    %v893 = vlaneseq
    %v894 = vshrl.u32 %v893, 7
    %v895 = vsub.s32 0, %v894
    %v896 = vrot.slane %v891, %v895
    %v897 = vadd.bf16 %v888, %v896
    %v898 = vmul.bf16 %v897, 1045249613
    %v899 = vmax.bf16 %v897, %v898
    %v900 = vld [vmem:[#allocation7] sm:$0xf]
    %v901 = vld [vmem:[#allocation7 + $0x4] sm:$0xf]
    %v902 = vld [vmem:[#allocation7 + $0x8] sm:$0xf]
    %v903 = vld [vmem:[#allocation7 + $0xc] sm:$0xf]
    %v904 = vld [vmem:[#allocation7 + $0x10] sm:$0xf]
    %v905 = vld [vmem:[#allocation7 + $0x14] sm:$0xf]
    %v906 = vld [vmem:[#allocation7 + $0x18] sm:$0xf]
    %v907 = vld [vmem:[#allocation7 + $0x1c] sm:$0xf]
    %v908 = vld [vmem:[#allocation7 + $0x20] sm:$0xf]
    %v909 = vld [vmem:[#allocation7 + $0x24] sm:$0xf]
    %v910 = vld [vmem:[#allocation7 + $0x28] sm:$0xf]
    %v911 = vld [vmem:[#allocation7 + $0x2c] sm:$0xf]
    %v912 = vld [vmem:[#allocation7 + $0x30] sm:$0xf]
    %v913 = vld [vmem:[#allocation7 + $0x34] sm:$0xf]
    %v914 = vld [vmem:[#allocation7 + $0x38] sm:$0xf]
    %v915 = vld [vmem:[#allocation7 + $0x3c] sm:$0xf]
    %v916 = vld [vmem:[%s5] sm:$0x1]
    %v918 = vlaneseq
    %v919 = vshrl.u32 %v918, 7
    %v920 = vsub.s32 0, %v919
    %v921 = vrot.slane %v916, %v920
    %v939 = vunpack.c.l.b16 %v900
    %v940 = vunpack.c.l.b16 %v901
    %v941 = vunpack.c.l.b16 %v902
    %v942 = vunpack.c.l.b16 %v903
    %v943 = vunpack.c.l.b16 %v904
    %v944 = vunpack.c.l.b16 %v905
    %v945 = vunpack.c.l.b16 %v906
    %v946 = vunpack.c.l.b16 %v907
    %v947 = vunpack.c.l.b16 %v908
    %v948 = vunpack.c.l.b16 %v909
    %v949 = vunpack.c.l.b16 %v910
    %v950 = vunpack.c.l.b16 %v911
    %v951 = vunpack.c.l.b16 %v912
    %v952 = vunpack.c.l.b16 %v913
    %v953 = vunpack.c.l.b16 %v914
    %v954 = vunpack.c.l.b16 %v915
    %v955 = vpack.c.b16 %v940, %v939
    %v956 = vpack.c.b16 %v942, %v941
    %v957 = vpack.c.b16 %v944, %v943
    %v958 = vpack.c.b16 %v946, %v945
    %v959 = vpack.c.b16 %v948, %v947
    %v960 = vpack.c.b16 %v950, %v949
    %v961 = vpack.c.b16 %v952, %v951
    %v962 = vpack.c.b16 %v954, %v953
    %971 = vmatprep.subr.bf16.mxu0 0
    %972 = vmatpush1.bf16.msra.mxu0 %v955
    %973 = vmatprep.subr.bf16.mxu0 0
    %974 = vmatpush1.bf16.msra.mxu0 %v956
    %975 = vmatprep.subr.bf16.mxu0 0
    %976 = vmatpush1.bf16.msra.mxu0 %v957
    %977 = vmatprep.subr.bf16.mxu0 0
    %978 = vmatpush1.bf16.msra.mxu0 %v958
    %979 = vmatprep.subr.bf16.mxu0 0
    %980 = vmatpush1.bf16.msra.mxu0 %v959
    %981 = vmatprep.subr.bf16.mxu0 0
    %982 = vmatpush1.bf16.msra.mxu0 %v960
    %983 = vmatprep.subr.bf16.mxu0 0
    %984 = vmatpush1.bf16.msra.mxu0 %v961
    %985 = vmatprep.subr.bf16.mxu0 0
    %986 = vmatpush1.bf16.msra.mxu0 %v962
    %987 = vmatprep.subr.bf16.mxu0 0
    %988 = vmatpush1.bf16.msra.mxu0 0
    %989 = vmatprep.subr.bf16.mxu0 0
    %990 = vmatpush1.bf16.msra.mxu0 0
    %991 = vmatprep.subr.bf16.mxu0 0
    %992 = vmatpush1.bf16.msra.mxu0 0
    %993 = vmatprep.subr.bf16.mxu0 0
    %994 = vmatpush1.bf16.msra.mxu0 0
    %995 = vmatprep.subr.bf16.mxu0 0
    %996 = vmatpush1.bf16.msra.mxu0 0
    %997 = vmatprep.subr.bf16.mxu0 0
    %998 = vmatpush1.bf16.msra.mxu0 0
    %999 = vmatprep.subr.bf16.mxu0 0
    %1000 = vmatpush1.bf16.msra.mxu0 0
    %1001 = vmatprep.subr.bf16.mxu0 0
    %1002 = vmatpush1.bf16.msra.mxu0 0
    %1003 = vmatprep.mubr.bf16.mxu0 0
    %1004 = vmatmul.mubr.bf16.gmra.mrb[0].mxu0 %v899
    %v1005 = vpop.f32.mrb[0].mxu0
    %v1006 = vadd.f32 %v921, %v1005
    %v1007 = vpop.f32.mrb[0].mxu0
    %v1008 = vpop.f32.mrb[0].mxu0
    %v1009 = vpop.f32.mrb[0].mxu0
    %1010 = vdwg.mxu0
    %1011 = vst [vmem:[#allocation8] sm:$0xff] %v1006
    // Predicated region
    $region38: #{_mapping_forward.1} parent=1 // pred_check
      _
    $region39: #{_mapping_forward.1} parent=1 // pred_check_branch
      %1013 = sbr.rel (0) target = $region41
    $region40: #{_mapping_forward.1} parent=1 // pred_region
      %s1015 = ssub.s32 128, 128
      %1016 = vsyncadd [#allocation4], %s1015
      %s1018 = sshll.u32 [#allocation8], 4
      %s1019 = int_to_ptr.vmem [resolvable:$true] %s1018
      %1021 = dma.vmem_to_hbm [thread:$0]  %s1019, 128, %s6, [#allocation4]
    $region41: #{_mapping_forward.1} parent=1 // pred_fallthru
      _
    // Predicated region
    $region42: #{_mapping_forward.1} parent=1 // pred_check
      _
    $region43: #{_mapping_forward.1} parent=1 // pred_check_branch
      %1023 = sbr.rel (0) target = $region45
    $region44: #{_mapping_forward.1} parent=1 // pred_region
      %1024 = dma.done [#allocation4], 128
    $region45: #{_mapping_forward.1} parent=1 // pred_fallthru
      _
    %1025 = vsyncpa [#allocation3], 1
    %1026 = vsyncpa [#allocation6], 1
    %1027 = vsyncpa [#allocation4], 1

</llo_original>
